<compile_context>
chip_gen: v6e
topology: v6e:2x2x1
jax: 0.10.0
libtpu: 0.0.40
codegen_flags: <defaults>
</compile_context>

<pallas_src>
import jax
import jax.numpy as jnp
from jax.experimental import pallas as pl
from jax.experimental.pallas import tpu as pltpu


_MiB = 1024 * 1024
# Lane-dense column widths (multiples of 128), widest first.
_COL_CANDIDATES = (8192, 4096, 2048, 1024, 512, 256, 128)


def _cdiv(a, b):
    return -(-a // b)


def _combine_kernel(mu1_ref, mu2_ref, std1_ref, std2_ref, mu_out_ref, std_out_ref):
    # Elementwise hot path: two VPU adds on the current VMEM tile.
    mu_out_ref[...] = mu1_ref[...] + mu2_ref[...]
    std_out_ref[...] = std1_ref[...] + std2_ref[...]


def _vmem_budget():
    """Generation-aware (per_array_tile_bytes, vmem_limit_bytes)."""
    try:
        vmem_cap = int(pltpu.get_tpu_info().vmem_capacity_bytes)
    except Exception:
        vmem_cap = 64 * _MiB  # conservative fallback (v7x per-TC size)
    # 4 inputs + 2 outputs, double-buffered -> 12 live tiles.  Let them use at
    # most 3/4 of VMEM and never exceed 8 MiB per array:
    #   v5e/v6e (128 MiB): 8 MiB/array;  v7x (64 MiB): 4 MiB/array.
    buffer_budget = (vmem_cap * 3) // 4
    tile_bytes = max(512 * 1024, min(8 * _MiB, buffer_budget // 12))
    vmem_limit = min(vmem_cap - 8 * _MiB, 12 * tile_bytes + 16 * _MiB)
    vmem_limit = max(vmem_limit, 32 * _MiB)
    return tile_bytes, int(vmem_limit)


def _pick_tile(extent, gran, max_tile):
    """Tile size (multiple of `gran`, <= max_tile) and grid length for `extent`.

    Aims for >= 4 grid steps (software pipelining) and an even grid length
    (v7x megacore shards the 1-D "parallel" axis across 2 TensorCores)."""
    if extent <= gran:
        return extent, 1  # single full-extent block (always legal)
    max_steps = _cdiv(extent, gran)
    steps = _cdiv(extent, max_tile)            # steps forced by the VMEM cap
    steps = max(steps, min(4, max_steps))      # >= 4 steps when possible
    if steps > 1 and steps % 2 and steps + 1 <= max_steps:
        steps += 1                             # prefer an even split
    tile = _cdiv(_cdiv(extent, steps), gran) * gran   # <= max_tile by construction
    grid_len = _cdiv(extent, tile)
    if grid_len > 1 and grid_len % 2 and tile > gran:
        alt = tile - gran                      # best-effort nudge to an even grid
        alt_grid = _cdiv(extent, alt)
        if alt_grid % 2 == 0:
            tile, grid_len = alt, alt_grid
    return tile, grid_len


def _plan(n, itemsize):
    """Choose slab layout, tile and grid for n elements of the given itemsize."""
    tile_bytes, vmem_limit = _vmem_budget()
    sub = max(8, 32 // itemsize)  # sublane granularity (16 for bf16, 32 for int8)

    # Prefer a lane-dense 2-D factorization (rows, cols) with cols a wide
    # multiple of 128 that divides n exactly (reshape is a free bitcast).
    cols = None
    for c in _COL_CANDIDATES:     # widths that still leave >= sub full rows
        if n % c == 0 and n // c >= sub:
            cols = c
            break
    if cols is None:
        for c in _COL_CANDIDATES:  # tiny inputs: single full-extent block
            if n % c == 0:
                cols = c
                break

    if cols is not None:
        rows = n // cols
        max_tile_r = max(sub, (tile_bytes // (cols * itemsize)) // sub * sub)
        tile_r, grid_len = _pick_tile(rows, sub, max_tile_r)
        return {"kind": "2d", "rows": rows, "cols": cols, "tile": tile_r,
                "grid": grid_len, "vmem_limit": vmem_limit}

    # No clean lane-dense factorization: tile the flat 1-D array directly with
    # a block that is a multiple of 8*128 elements.  Pallas masks the ragged
    # last block, so there is NO jnp.pad copy in and NO slice copy out.
    gran = 128 * sub
    max_tile_e = max(gran, (tile_bytes // itemsize) // gran * gran)
    tile_e, grid_len = _pick_tile(n, gran, max_tile_e)
    return {"kind": "1d", "rows": n, "cols": None, "tile": tile_e,
            "grid": grid_len, "vmem_limit": vmem_limit}


def posterior_combination(posterior, *, donate=False):
    """posterior = [mu_1, mu_2, std_1, std_2], all same shape/dtype.

    Returns (mu_1 + mu_2, std_1 + std_2) with the original shape/dtype.
    If donate=True the outputs alias mu_1/std_1's buffers (only use when the
    caller no longer needs the inputs).
    """
    mu1, mu2, std1, std2 = posterior
    assert mu1.shape == mu2.shape == std1.shape == std2.shape
    assert mu1.dtype == mu2.dtype == std1.dtype == std2.dtype

    orig_shape = mu1.shape
    dtype = mu1.dtype
    n = int(mu1.size)
    itemsize = jnp.dtype(dtype).itemsize

    plan = _plan(n, itemsize)

    if plan["kind"] == "2d":
        slab_shape = (plan["rows"], plan["cols"])
        block_shape = (plan["tile"], plan["cols"])
        index_map = lambda i: (i, 0)
    else:
        slab_shape = (n,)
        block_shape = (plan["tile"],)
        index_map = lambda i: (i,)

    def to_slab(x):
        return x.reshape(slab_shape)  # contiguous reshape: no HBM copy

    spec = pl.BlockSpec(block_shape, index_map)
    out_sds = jax.ShapeDtypeStruct(slab_shape, dtype)

    io_aliases = {0: 0, 2: 1} if donate else {}

    mu_out, std_out = pl.pallas_call(
        _combine_kernel,
        out_shape=(out_sds, out_sds),
        grid_spec=pltpu.PrefetchScalarGridSpec(
            num_scalar_prefetch=0,
            grid=(plan["grid"],),
            in_specs=[spec, spec, spec, spec],
            out_specs=(spec, spec),
        ),
        input_output_aliases=io_aliases,
        compiler_params=pltpu.CompilerParams(
            dimension_semantics=("parallel",),
            vmem_limit_bytes=plan["vmem_limit"],
        ),
    )(to_slab(mu1), to_slab(mu2), to_slab(std1), to_slab(std2))

    return mu_out.reshape(orig_shape), std_out.reshape(orig_shape)


if __name__ == "__main__":
    key = jax.random.PRNGKey(0)
    k1, k2, k3, k4 = jax.random.split(key, 4)

    B, C, H, W = 2, 4, 16, 16  # NCHW, small demo shape
    mu_1 = jax.random.normal(k1, (B, C, H, W), dtype=jnp.float32)
    mu_2 = jax.random.normal(k2, (B, C, H, W), dtype=jnp.float32)
    std_1 = jax.nn.softplus(jax.random.normal(k3, (B, C, H, W), dtype=jnp.float32))
    std_2 = jax.nn.softplus(jax.random.normal(k4, (B, C, H, W), dtype=jnp.float32))

    mu_out, std_out = posterior_combination([mu_1, mu_2, std_1, std_2])
    jax.block_until_ready((mu_out, std_out))

    # Reference check against plain JAX.
    assert mu_out.shape == (B, C, H, W) and std_out.shape == (B, C, H, W)
    assert jnp.allclose(mu_out, mu_1 + mu_2, atol=1e-6)
    assert jnp.allclose(std_out, std_1 + std_2, atol=1e-6)

    print("KERNEL_OK")
</pallas_src>

<mosaic_0001>
module attributes {stable_mosaic.version = 11 : i64} {
  func.func @_combine_kernel(%arg0: i32, %arg1: memref<8x256xf32, #tpu.memory_space<vmem>>, %arg2: memref<8x256xf32, #tpu.memory_space<vmem>>, %arg3: memref<8x256xf32, #tpu.memory_space<vmem>>, %arg4: memref<8x256xf32, #tpu.memory_space<vmem>>, %arg5: memref<8x256xf32, #tpu.memory_space<vmem>>, %arg6: memref<8x256xf32, #tpu.memory_space<vmem>>) attributes {dimension_semantics = [#tpu.dimension_semantics<parallel>], iteration_bounds = array<i64: 1>, scalar_prefetch = 0 : i64, scratch_operands = 0 : i64, tpu.core_type = #tpu.core_type<tc>, window_params = [{transform_indices = @transform_0, window_bounds = array<i64: 8, 256>}, {transform_indices = @transform_1, window_bounds = array<i64: 8, 256>}, {transform_indices = @transform_2, window_bounds = array<i64: 8, 256>}, {transform_indices = @transform_3, window_bounds = array<i64: 8, 256>}, {transform_indices = @transform_4, window_bounds = array<i64: 8, 256>}, {transform_indices = @transform_5, window_bounds = array<i64: 8, 256>}]} {
    %c0 = arith.constant 0 : index
    %c0_0 = arith.constant 0 : index
    %0 = vector.load %arg1[%c0, %c0_0] : memref<8x256xf32, #tpu.memory_space<vmem>>, vector<8x256xf32>
    %c0_1 = arith.constant 0 : index
    %c0_2 = arith.constant 0 : index
    %1 = vector.load %arg2[%c0_1, %c0_2] : memref<8x256xf32, #tpu.memory_space<vmem>>, vector<8x256xf32>
    %2 = arith.addf %0, %1 : vector<8x256xf32>
    %c0_3 = arith.constant 0 : index
    %c0_4 = arith.constant 0 : index
    %3 = vector.load %arg5[%c0_3, %c0_4] : memref<8x256xf32, #tpu.memory_space<vmem>>, vector<8x256xf32>
    tpu.vector_store %arg5[%c0_3, %c0_4], %2 {strides = array<i32>} : memref<8x256xf32, #tpu.memory_space<vmem>>, vector<8x256xf32>,
    %c0_5 = arith.constant 0 : index
    %c0_6 = arith.constant 0 : index
    %4 = vector.load %arg3[%c0_5, %c0_6] : memref<8x256xf32, #tpu.memory_space<vmem>>, vector<8x256xf32>
    %c0_7 = arith.constant 0 : index
    %c0_8 = arith.constant 0 : index
    %5 = vector.load %arg4[%c0_7, %c0_8] : memref<8x256xf32, #tpu.memory_space<vmem>>, vector<8x256xf32>
    %6 = arith.addf %4, %5 : vector<8x256xf32>
    %c0_9 = arith.constant 0 : index
    %c0_10 = arith.constant 0 : index
    %7 = vector.load %arg6[%c0_9, %c0_10] : memref<8x256xf32, #tpu.memory_space<vmem>>, vector<8x256xf32>
    tpu.vector_store %arg6[%c0_9, %c0_10], %6 {strides = array<i32>} : memref<8x256xf32, #tpu.memory_space<vmem>>, vector<8x256xf32>,
    return
  }
  func.func @transform_0(%arg0: i32) -> (i32, i32) {
    %c0_i32 = arith.constant 0 : i32
    %c0_i32_0 = arith.constant 0 : i32
    return %arg0, %c0_i32 : i32, i32
  }
  func.func @transform_1(%arg0: i32) -> (i32, i32) {
    %c0_i32 = arith.constant 0 : i32
    %c0_i32_0 = arith.constant 0 : i32
    return %arg0, %c0_i32 : i32, i32
  }
  func.func @transform_2(%arg0: i32) -> (i32, i32) {
    %c0_i32 = arith.constant 0 : i32
    %c0_i32_0 = arith.constant 0 : i32
    return %arg0, %c0_i32 : i32, i32
  }
  func.func @transform_3(%arg0: i32) -> (i32, i32) {
    %c0_i32 = arith.constant 0 : i32
    %c0_i32_0 = arith.constant 0 : i32
    return %arg0, %c0_i32 : i32, i32
  }
  func.func @transform_4(%arg0: i32) -> (i32, i32) {
    %c0_i32 = arith.constant 0 : i32
    %c0_i32_0 = arith.constant 0 : i32
    return %arg0, %c0_i32 : i32, i32
  }
  func.func @transform_5(%arg0: i32) -> (i32, i32) {
    %c0_i32 = arith.constant 0 : i32
    %c0_i32_0 = arith.constant 0 : i32
    return %arg0, %c0_i32 : i32, i32
  }
}

</mosaic_0001>

<llo_original>
// kernel: tpu_custom_call.1
$region0: #{tpu_custom_call.1}
  #allocation0 [shape = 'u32[]', space=smem, size = 0x4, offset = 0x4, fixed_abs, tag = 'smem constant byte address 0x4 - core index']
  #allocation1 [shape = 'u32[144,128]{1,0:T(1,128)}', space=vmem, size = 0x12000, scoped, tag = 'internal scratch']
  %s0 = inlined_call_operand.hbm [shape: f32[8,256], index: 0, kind: input, shape index: {}]
  %s1 = inlined_call_operand.hbm [shape: f32[8,256], index: 1, kind: input, shape index: {}]
  %s2 = inlined_call_operand.hbm [shape: f32[8,256], index: 2, kind: input, shape index: {}]
  %s3 = inlined_call_operand.hbm [shape: f32[8,256], index: 3, kind: input, shape index: {}]
  %s4 = inlined_call_operand.hbm [shape: f32[8,256], index: 4, kind: output, shape index: {0}]
  %s5 = inlined_call_operand.hbm [shape: f32[8,256], index: 5, kind: output, shape index: {1}]
  %6 = xla_tuple %s4, %s5
  %s7 = sld [smem:[#allocation0]]
  $region50: #{tpu_custom_call.1} parent=0
    _
  %s9 = ssub.s32 1, %s7
  %s10 = scalar_select 0, %s9, %s7
  $region1: #{tpu_custom_call.1} parent=0
    #allocation2 [shape = 'u8[8192]{0}', space=vmem, size = 0x2000, scoped, tag = 'input window, operand 0, single buffered']
    #allocation3 [shape = 's32[1]{0}', space=sflag, size = 0x4, scoped, tag = 'scoped memory for tpu_custom_call.1']
    #allocation4 [shape = 's32[1]{0}', space=sflag, size = 0x4, scoped, tag = 'scoped memory for tpu_custom_call.1']
    #allocation5 [shape = 'u8[8192]{0}', space=vmem, size = 0x2000, scoped, tag = 'input window, operand 1, single buffered']
    #allocation6 [shape = 's32[1]{0}', space=sflag, size = 0x4, scoped, tag = 'scoped memory for tpu_custom_call.1']
    #allocation7 [shape = 'u8[8192]{0}', space=vmem, size = 0x2000, scoped, tag = 'input window, operand 2, single buffered']
    #allocation8 [shape = 'u8[8192]{0}', space=vmem, size = 0x2000, scoped, tag = 'input window, operand 3, single buffered']
    #allocation9 [shape = 's32[1]{0}', space=sflag, size = 0x4, scoped, tag = 'scoped memory for tpu_custom_call.1']
    #allocation10 [shape = 'u8[8192]{0}', space=vmem, size = 0x2000, scoped, tag = 'output window, operand 0, single buffered']
    #allocation11 [shape = 'u8[8192]{0}', space=vmem, size = 0x2000, scoped, tag = 'output window, operand 1, single buffered']
    #allocation12 [shape = 's32[1]{0}', space=sflag, size = 0x4, scoped, tag = 'scoped memory for tpu_custom_call.1']
    %11 = vsyncpa [#allocation3], 0
    %12 = vsyncpa [#allocation6], 0
    %13 = vsyncpa [#allocation9], 0
    %14 = vsyncpa [#allocation4], 0
    %15 = vsyncpa [#allocation12], 0
    // Predicated region
    $region2: #{tpu_custom_call.1} parent=1 // pred_check
      _
    $region3: #{tpu_custom_call.1} parent=1 // pred_check_branch
      %17 = sbr.rel (0) target = $region5
    $region4: #{tpu_custom_call.1} parent=1 // pred_region
      %s19 = ssub.s32 256, 256
      %20 = vsyncadd [#allocation3], %s19
      %s22 = sshll.u32 [#allocation2], 4
      %s23 = int_to_ptr.vmem [resolvable:$true] %s22
      %25 = dma.hbm_to_vmem [thread:$0]  %s0, 256, %s23, [#allocation3]
    $region5: #{tpu_custom_call.1} parent=1 // pred_fallthru
      _
    // Predicated region
    $region6: #{tpu_custom_call.1} parent=1 // pred_check
      _
    $region7: #{tpu_custom_call.1} parent=1 // pred_check_branch
      %27 = sbr.rel (0) target = $region9
    $region8: #{tpu_custom_call.1} parent=1 // pred_region
      %s29 = ssub.s32 256, 256
      %30 = vsyncadd [#allocation6], %s29
      %s32 = sshll.u32 [#allocation5], 4
      %s33 = int_to_ptr.vmem [resolvable:$true] %s32
      %35 = dma.hbm_to_vmem [thread:$0]  %s1, 256, %s33, [#allocation6]
    $region9: #{tpu_custom_call.1} parent=1 // pred_fallthru
      _
    // Predicated region
    $region10: #{tpu_custom_call.1} parent=1 // pred_check
      _
    $region11: #{tpu_custom_call.1} parent=1 // pred_check_branch
      %37 = sbr.rel (0) target = $region13
    $region12: #{tpu_custom_call.1} parent=1 // pred_region
      %s39 = ssub.s32 256, 256
      %40 = vsyncadd [#allocation6], %s39
      %s42 = sshll.u32 [#allocation7], 4
      %s43 = int_to_ptr.vmem [resolvable:$true] %s42
      %45 = dma.hbm_to_vmem [thread:$0]  %s2, 256, %s43, [#allocation6]
    $region13: #{tpu_custom_call.1} parent=1 // pred_fallthru
      _
    // Predicated region
    $region14: #{tpu_custom_call.1} parent=1 // pred_check
      _
    $region15: #{tpu_custom_call.1} parent=1 // pred_check_branch
      %47 = sbr.rel (0) target = $region17
    $region16: #{tpu_custom_call.1} parent=1 // pred_region
      %s49 = ssub.s32 256, 256
      %50 = vsyncadd [#allocation9], %s49
      %s52 = sshll.u32 [#allocation8], 4
      %s53 = int_to_ptr.vmem [resolvable:$true] %s52
      %55 = dma.hbm_to_vmem [thread:$0]  %s3, 256, %s53, [#allocation9]
    $region17: #{tpu_custom_call.1} parent=1 // pred_fallthru
      _
    // Predicated region
    $region18: #{tpu_custom_call.1} parent=1 // pred_check
      _
    $region19: #{tpu_custom_call.1} parent=1 // pred_check_branch
      %57 = sbr.rel (0) target = $region21
    $region20: #{tpu_custom_call.1} parent=1 // pred_region
      %58 = dma.done [#allocation3], 256
    $region21: #{tpu_custom_call.1} parent=1 // pred_fallthru
      _
    // Predicated region
    $region22: #{tpu_custom_call.1} parent=1 // pred_check
      _
    $region23: #{tpu_custom_call.1} parent=1 // pred_check_branch
      %60 = sbr.rel (0) target = $region25
    $region24: #{tpu_custom_call.1} parent=1 // pred_region
      %61 = dma.done [#allocation6], 256
    $region25: #{tpu_custom_call.1} parent=1 // pred_fallthru
      _
    // Predicated region
    $region26: #{tpu_custom_call.1} parent=1 // pred_check
      _
    $region27: #{tpu_custom_call.1} parent=1 // pred_check_branch
      %63 = sbr.rel (0) target = $region29
    $region28: #{tpu_custom_call.1} parent=1 // pred_region
      %64 = dma.done [#allocation6], 256
    $region29: #{tpu_custom_call.1} parent=1 // pred_fallthru
      _
    // Predicated region
    $region30: #{tpu_custom_call.1} parent=1 // pred_check
      _
    $region31: #{tpu_custom_call.1} parent=1 // pred_check_branch
      %66 = sbr.rel (0) target = $region33
    $region32: #{tpu_custom_call.1} parent=1 // pred_region
      %67 = dma.done [#allocation9], 256
    $region33: #{tpu_custom_call.1} parent=1 // pred_fallthru
      _
    %v68 = vld [vmem:[#allocation2] sm:$0xff]
    %v69 = vld [vmem:[#allocation2 + $0x8] sm:$0xff]
    %v70 = vld [vmem:[#allocation5] sm:$0xff]
    %v71 = vld [vmem:[#allocation5 + $0x8] sm:$0xff]
    %v72 = vadd.f32 %v68, %v70
    %v73 = vadd.f32 %v69, %v71
    %74 = vst [vmem:[#allocation10] sm:$0xff] %v72
    %75 = vst [vmem:[#allocation10 + $0x8] sm:$0xff] %v73
    %v76 = vld [vmem:[#allocation7] sm:$0xff]
    %v77 = vld [vmem:[#allocation7 + $0x8] sm:$0xff]
    %v78 = vld [vmem:[#allocation8] sm:$0xff]
    %v79 = vld [vmem:[#allocation8 + $0x8] sm:$0xff]
    %v80 = vadd.f32 %v76, %v78
    %v81 = vadd.f32 %v77, %v79
    %82 = vst [vmem:[#allocation11] sm:$0xff] %v80
    %83 = vst [vmem:[#allocation11 + $0x8] sm:$0xff] %v81
    // Predicated region
    $region34: #{tpu_custom_call.1} parent=1 // pred_check
      _
    $region35: #{tpu_custom_call.1} parent=1 // pred_check_branch
      %85 = sbr.rel (0) target = $region37
    $region36: #{tpu_custom_call.1} parent=1 // pred_region
      %s87 = ssub.s32 256, 256
      %88 = vsyncadd [#allocation4], %s87
      %s90 = sshll.u32 [#allocation10], 4
      %s91 = int_to_ptr.vmem [resolvable:$true] %s90
      %93 = dma.vmem_to_hbm [thread:$0]  %s91, 256, %s4, [#allocation4]
    $region37: #{tpu_custom_call.1} parent=1 // pred_fallthru
      _
    // Predicated region
    $region38: #{tpu_custom_call.1} parent=1 // pred_check
      _
    $region39: #{tpu_custom_call.1} parent=1 // pred_check_branch
      %95 = sbr.rel (0) target = $region41
    $region40: #{tpu_custom_call.1} parent=1 // pred_region
      %s97 = ssub.s32 256, 256
      %98 = vsyncadd [#allocation12], %s97
      %s100 = sshll.u32 [#allocation11], 4
      %s101 = int_to_ptr.vmem [resolvable:$true] %s100
      %103 = dma.vmem_to_hbm [thread:$0]  %s101, 256, %s5, [#allocation12]
    $region41: #{tpu_custom_call.1} parent=1 // pred_fallthru
      _
    // Predicated region
    $region42: #{tpu_custom_call.1} parent=1 // pred_check
      _
    $region43: #{tpu_custom_call.1} parent=1 // pred_check_branch
      %105 = sbr.rel (0) target = $region45
    $region44: #{tpu_custom_call.1} parent=1 // pred_region
      %106 = dma.done [#allocation4], 256
    $region45: #{tpu_custom_call.1} parent=1 // pred_fallthru
      _
    // Predicated region
    $region46: #{tpu_custom_call.1} parent=1 // pred_check
      _
    $region47: #{tpu_custom_call.1} parent=1 // pred_check_branch
      %108 = sbr.rel (0) target = $region49
    $region48: #{tpu_custom_call.1} parent=1 // pred_region
      %109 = dma.done [#allocation12], 256
    $region49: #{tpu_custom_call.1} parent=1 // pred_fallthru
      _
    %110 = vsyncpa [#allocation3], 1
    %111 = vsyncpa [#allocation6], 1
    %112 = vsyncpa [#allocation9], 1
    %113 = vsyncpa [#allocation4], 1
    %114 = vsyncpa [#allocation12], 1

</llo_original>
